<compile_context>
chip_gen: v7x
topology: tpu7x:2x2x1
jax: 0.10.0
libtpu: 0.0.40
codegen_flags: <defaults>
</compile_context>

<pallas_src>
import functools

import jax
import jax.numpy as jnp
from jax.experimental import pallas as pl
from jax.experimental.pallas import tpu as pltpu


# ----------------------------------------------------------------------------
# Kernel 1: one LightGCN propagation layer   E_out = G @ E_in
# ----------------------------------------------------------------------------
def _propagate_kernel(kmap_ref, kvalid_ref, g_ref, e_ref, o_ref, *, tk, resident_e):
    k = pl.program_id(1)

    @pl.when(k == 0)
    def _():
        o_ref[...] = jnp.zeros_like(o_ref)

    idx = pl.program_id(0) * pl.num_programs(1) + k

    @pl.when(kvalid_ref[idx] != 0)
    def _():
        if resident_e:
            # Full E is resident in VMEM; slice the k-th (tk, D) chunk dynamically
            # using the scalar-prefetched block map (start is tk-aligned -> cheap).
            start = pl.multiple_of(kmap_ref[idx] * tk, tk)
            e_tile = e_ref[pl.ds(start, tk), :]
        else:
            e_tile = e_ref[...]

        # bf16 x bf16 MXU matmul, f32 accumulation directly into the resident output.
        o_ref[...] += jnp.dot(
            g_ref[...], e_tile.astype(g_ref.dtype),
            preferred_element_type=jnp.float32,
        )


def _pick_tile(n: int, boundary: int, want: int, align: int = 128):
    """Largest tile t <= want with t % align == 0 and n % t == 0.

    Prefers (within 2x) a tile that keeps the user/item `boundary` block-aligned,
    since that enables skipping the structurally-zero bipartite quadrants (2x).
    Returns (tile, boundary_aligned).
    """
    candidates = []
    t = (min(want, n) // align) * align
    while t >= align:
        if n % t == 0:
            candidates.append(t)
        t -= align
    if not candidates:
        return n, (boundary % n == 0)
    best = candidates[0]
    for t in candidates:
        if boundary % t == 0:
            if 2 * t >= best:
                return t, True
            break
    return best, (boundary % best == 0)


def propagate(
    graph: jax.Array,
    emb: jax.Array,
    num_users: int,
    num_items: int,
    *,
    tm: int = 512,
    tk: int = 512,
    resident_e: bool | None = None,
):
    """One layer of LightGCN propagation: graph @ emb (graph may be bf16)."""
    n, d = emb.shape
    assert graph.shape == (n, n)
    assert emb.dtype == jnp.float32  # f32 accumulation happens in the output block

    tm, tm_aligned = _pick_tile(n, num_users, tm)
    tk, tk_aligned = _pick_tile(n, num_users, tk)
    n_i = n // tm
    n_k_total = n // tk
    skip = tm_aligned and tk_aligned and 0 < num_users < n

    # Per-row-block list of (potentially) nonzero column blocks + validity flags.
    if skip:
        nu_k = num_users // tk
        ni_k = num_items // tk
        n_k = max(nu_k, ni_k)
        cols_rows, valid_rows = [], []
        for i in range(n_i):
            if (i + 1) * tm <= num_users:
                cols = list(range(nu_k, nu_k + ni_k))   # user rows -> item columns
            else:
                cols = list(range(nu_k))                 # item rows -> user columns
            npad = n_k - len(cols)
            valid = [1] * len(cols) + [0] * npad
            cols = cols + [cols[-1]] * npad              # repeat -> no extra DMA
            cols_rows.append(cols)
            valid_rows.append(valid)
        kmap = jnp.asarray(cols_rows, dtype=jnp.int32).reshape(-1)
        kvalid = jnp.asarray(valid_rows, dtype=jnp.int32).reshape(-1)
    else:
        n_k = n_k_total
        kmap = jnp.tile(jnp.arange(n_k, dtype=jnp.int32), n_i)
        kvalid = jnp.ones((n_i * n_k,), dtype=jnp.int32)

    # VMEM budgeting (keep safe on v7x's 64 MiB physical VMEM / v5e's small default).
    g_bytes = 2 * tm * tk * graph.dtype.itemsize       # double-buffered G tiles
    o_bytes = 2 * tm * d * emb.dtype.itemsize          # resident output block
    e_resident_bytes = 2 * n * d * emb.dtype.itemsize  # whole E (up to 2 buffers)
    e_stream_bytes = 2 * tk * d * emb.dtype.itemsize
    if resident_e is None:
        resident_e = (g_bytes + o_bytes + e_resident_bytes) <= (40 << 20)
    need = g_bytes + o_bytes + (e_resident_bytes if resident_e else e_stream_bytes)
    vmem_limit = int(min(max(2 * need, 16 << 20), 48 << 20))

    if resident_e:
        e_spec = pl.BlockSpec((n, d), lambda i, k, kmap, kvalid: (0, 0))
    else:
        e_spec = pl.BlockSpec((tk, d), lambda i, k, kmap, kvalid: (kmap[i * n_k + k], 0))
    g_spec = pl.BlockSpec((tm, tk), lambda i, k, kmap, kvalid: (i, kmap[i * n_k + k]))

    kernel = functools.partial(_propagate_kernel, tk=tk, resident_e=resident_e)

    return pl.pallas_call(
        kernel,
        out_shape=jax.ShapeDtypeStruct((n, d), emb.dtype),
        grid_spec=pltpu.PrefetchScalarGridSpec(
            num_scalar_prefetch=2,
            grid=(n_i, n_k),
            in_specs=[g_spec, e_spec],
            out_specs=pl.BlockSpec((tm, d), lambda i, k, kmap, kvalid: (i, 0)),
        ),
        compiler_params=pltpu.CompilerParams(
            dimension_semantics=("parallel", "arbitrary"),
            vmem_limit_bytes=vmem_limit,
        ),
    )(kmap, kvalid, graph, emb)


# ----------------------------------------------------------------------------
# Kernel 2: forward score   gamma[b] = sum_d users_emb[b,d] * items_emb[b,d]
# Lane-dense layout: inputs transposed to (D, B_pad), output (1, B_pad).
# ----------------------------------------------------------------------------
def _score_kernel(u_ref, i_ref, o_ref):
    prod = u_ref[...].astype(jnp.float32) * i_ref[...].astype(jnp.float32)
    o_ref[...] = jnp.sum(prod, axis=0, keepdims=True).astype(o_ref.dtype)


def score(users_emb: jax.Array, items_emb: jax.Array, *, tb: int = 128):
    b, d = users_emb.shape
    b_pad = ((b + tb - 1) // tb) * tb
    u_t = jnp.zeros((d, b_pad), users_emb.dtype).at[:, :b].set(users_emb.T)
    i_t = jnp.zeros((d, b_pad), items_emb.dtype).at[:, :b].set(items_emb.T)

    out = pl.pallas_call(
        _score_kernel,
        out_shape=jax.ShapeDtypeStruct((1, b_pad), jnp.float32),
        grid_spec=pltpu.PrefetchScalarGridSpec(
            num_scalar_prefetch=0,
            grid=(b_pad // tb,),
            in_specs=[
                pl.BlockSpec((d, tb), lambda j: (0, j)),
                pl.BlockSpec((d, tb), lambda j: (0, j)),
            ],
            out_specs=pl.BlockSpec((1, tb), lambda j: (0, j)),
        ),
        compiler_params=pltpu.CompilerParams(dimension_semantics=("parallel",)),
    )(u_t, i_t)
    return out[0, :b]


# ----------------------------------------------------------------------------
# LightGCN in JAX (glue) + Pallas hot paths
# ----------------------------------------------------------------------------
class LightGCNPallas:
    def __init__(self, num_users, num_items, latent_dim, n_layers, key):
        self.num_users = num_users
        self.num_items = num_items
        self.latent_dim = latent_dim
        self.n_layers = n_layers

        ku, ki, kg = jax.random.split(key, 3)
        # nn.init.normal_(std=0.1)
        self.embedding_user = 0.1 * jax.random.normal(
            ku, (num_users, latent_dim), dtype=jnp.float32
        )
        self.embedding_item = 0.1 * jax.random.normal(
            ki, (num_items, latent_dim), dtype=jnp.float32
        )

        # Deterministic synthetic normalized bipartite adjacency (the "Graph"),
        # stored in bf16 (dominant HBM stream of the propagation kernel).
        n = num_users + num_items
        r = (jax.random.uniform(kg, (num_users, num_items)) < 0.1).astype(jnp.float32)
        adj = jnp.zeros((n, n), dtype=jnp.float32)
        adj = adj.at[:num_users, num_users:].set(r)
        adj = adj.at[num_users:, :num_users].set(r.T)
        deg = jnp.sum(adj, axis=1)
        d_inv_sqrt = jnp.where(deg > 0, 1.0 / jnp.sqrt(deg), 0.0)
        self.graph = (adj * d_inv_sqrt[:, None] * d_inv_sqrt[None, :]).astype(
            jnp.bfloat16
        )

    def computer(self):
        all_emb = jnp.concatenate([self.embedding_user, self.embedding_item], axis=0)
        acc = all_emb  # fused layer-mean: running sum, no (N, L+1, D) stack
        for _ in range(self.n_layers):
            all_emb = propagate(self.graph, all_emb, self.num_users, self.num_items)
            acc = acc + all_emb
        light_out = acc / (self.n_layers + 1)
        users = light_out[: self.num_users]
        items = light_out[self.num_users:]
        return users, items

    def forward(self, users, items):
        all_users, all_items = self.computer()
        users_emb = all_users[users]            # gather (glue)
        items_emb = all_items[items]
        return score(users_emb, items_emb)      # Pallas elementwise + lane-dense reduce

    # pure-JAX reference (faithful to the torch stack+mean formulation)
    def forward_ref(self, users, items):
        g = self.graph.astype(jnp.float32)
        all_emb = jnp.concatenate([self.embedding_user, self.embedding_item], axis=0)
        embs = [all_emb]
        for _ in range(self.n_layers):
            all_emb = g @ all_emb
            embs.append(all_emb)
        light_out = jnp.mean(jnp.stack(embs, axis=1), axis=1)
        users_emb = light_out[: self.num_users][users]
        items_emb = light_out[self.num_users:][items]
        return jnp.sum(users_emb * items_emb, axis=1)


if __name__ == "__main__":
    key = jax.random.PRNGKey(0)
    k_model, k_u, k_i = jax.random.split(key, 3)

    num_users, num_items, latent_dim, n_layers = 128, 128, 64, 3
    model = LightGCNPallas(num_users, num_items, latent_dim, n_layers, k_model)

    batch = 8
    users = jax.random.randint(k_u, (batch,), 0, num_users)
    items = jax.random.randint(k_i, (batch,), 0, num_items)

    gamma = jax.block_until_ready(model.forward(users, items))
    gamma_ref = jax.block_until_ready(model.forward_ref(users, items))

    assert gamma.shape == (batch,)
    # bf16 graph + in-kernel bf16 MXU inputs -> loosened tolerance vs f32 reference.
    assert jnp.allclose(gamma, gamma_ref, atol=1e-2, rtol=5e-2), (gamma, gamma_ref)
    print("KERNEL_OK")
</pallas_src>

<mosaic_0001>
module attributes {stable_mosaic.version = 11 : i64} {
  func.func @_propagate_kernel(%arg0: i32, %arg1: i32, %arg2: memref<2xi32, #tpu.memory_space<smem>>, %arg3: memref<2xi32, #tpu.memory_space<smem>>, %arg4: memref<128x128xbf16, #tpu.memory_space<vmem>>, %arg5: memref<256x64xf32, #tpu.memory_space<vmem>>, %arg6: memref<128x64xf32, #tpu.memory_space<vmem>>) attributes {dimension_semantics = [#tpu.dimension_semantics<parallel>, #tpu.dimension_semantics<arbitrary>], iteration_bounds = array<i64: 2, 1>, scalar_prefetch = 2 : i64, scratch_operands = 0 : i64, tpu.core_type = #tpu.core_type<tc>, window_params = [{transform_indices = @transform_0, window_bounds = array<i64: 128, 128>}, {pipeline_mode = #tpu.pipeline_mode<synchronous>, transform_indices = @transform_1, window_bounds = array<i64: 256, 64>}, {transform_indices = @transform_2, window_bounds = array<i64: 128, 64>}]} {
    %c0_i32 = arith.constant 0 : i32
    %0 = arith.cmpi eq, %arg1, %c0_i32 : i32
    %1 = arith.extui %0 : i1 to i32
    %c0_i32_0 = arith.constant 0 : i32
    %2 = arith.cmpi ne, %1, %c0_i32_0 : i32
    scf.if %2 {
      %cst = arith.constant 0.000000e+00 : f32
      %10 = vector.broadcast %cst : f32 to vector<128x64xf32>
      %c0 = arith.constant 0 : index
      %c0_3 = arith.constant 0 : index
      %11 = vector.load %arg6[%c0, %c0_3] : memref<128x64xf32, #tpu.memory_space<vmem>>, vector<128x64xf32>
      tpu.vector_store %arg6[%c0, %c0_3], %10 {strides = array<i32>} : memref<128x64xf32, #tpu.memory_space<vmem>>, vector<128x64xf32>,
    } else {
    }
    %c1_i32 = arith.constant 1 : i32
    %3 = arith.muli %arg0, %c1_i32 : i32
    %4 = arith.addi %3, %arg1 : i32
    %5 = arith.index_cast %4 : i32 to index
    %6 = memref.load %arg3[%5] : memref<2xi32, #tpu.memory_space<smem>>
    %c0_i32_1 = arith.constant 0 : i32
    %7 = arith.cmpi ne, %6, %c0_i32_1 : i32
    %8 = arith.extui %7 : i1 to i32
    %c0_i32_2 = arith.constant 0 : i32
    %9 = arith.cmpi ne, %8, %c0_i32_2 : i32
    scf.if %9 {
      %10 = arith.index_cast %4 : i32 to index
      %11 = memref.load %arg2[%10] : memref<2xi32, #tpu.memory_space<smem>>
      %c128_i32 = arith.constant 128 : i32
      %12 = arith.muli %11, %c128_i32 : i32
      %13 = tpu.assume_multiple %12, 128 : i32
      %14 = arith.index_cast %13 : i32 to index
      %c0 = arith.constant 0 : index
      %15 = vector.load %arg5[%14, %c0] : memref<256x64xf32, #tpu.memory_space<vmem>>, vector<128x64xf32>
      %c0_3 = arith.constant 0 : index
      %c0_4 = arith.constant 0 : index
      %16 = vector.load %arg6[%c0_3, %c0_4] : memref<128x64xf32, #tpu.memory_space<vmem>>, vector<128x64xf32>
      %c0_5 = arith.constant 0 : index
      %c0_6 = arith.constant 0 : index
      %17 = vector.load %arg4[%c0_5, %c0_6] : memref<128x128xbf16, #tpu.memory_space<vmem>>, vector<128x128xbf16>
      %18 = arith.truncf %15 : vector<128x64xf32> to vector<128x64xbf16>
      %cst = arith.constant dense<0.000000e+00> : vector<128x64xf32>
      %19 = tpu.matmul %17, %18, %cst {dimension_numbers = #tpu.dot_dimension_numbers<[1], [0], [0], [1], [0, 0, 1, 1], [], []>} : vector<128x128xbf16>, vector<128x64xbf16>, vector<128x64xf32> -> vector<128x64xf32>
      %20 = arith.addf %16, %19 : vector<128x64xf32>
      %c0_7 = arith.constant 0 : index
      %c0_8 = arith.constant 0 : index
      %21 = vector.load %arg6[%c0_7, %c0_8] : memref<128x64xf32, #tpu.memory_space<vmem>>, vector<128x64xf32>
      tpu.vector_store %arg6[%c0_7, %c0_8], %20 {strides = array<i32>} : memref<128x64xf32, #tpu.memory_space<vmem>>, vector<128x64xf32>,
    } else {
    }
    return
  }
  func.func @transform_0(%arg0: i32, %arg1: i32, %arg2: memref<2xi32, #tpu.memory_space<smem>>, %arg3: memref<2xi32, #tpu.memory_space<smem>>) -> (i32, i32) {
    %c1_i32 = arith.constant 1 : i32
    %0 = arith.muli %arg0, %c1_i32 : i32
    %1 = arith.addi %0, %arg1 : i32
    %2 = arith.index_cast %1 : i32 to index
    %3 = memref.load %arg2[%2] : memref<2xi32, #tpu.memory_space<smem>>
    %c0_i32 = arith.constant 0 : i32
    return %arg0, %3 : i32, i32
  }
  func.func @transform_1(%arg0: i32, %arg1: i32, %arg2: memref<2xi32, #tpu.memory_space<smem>>, %arg3: memref<2xi32, #tpu.memory_space<smem>>) -> (i32, i32) {
    %c0_i32 = arith.constant 0 : i32
    %c0_i32_0 = arith.constant 0 : i32
    %c0_i32_1 = arith.constant 0 : i32
    return %c0_i32, %c0_i32_0 : i32, i32
  }
  func.func @transform_2(%arg0: i32, %arg1: i32, %arg2: memref<2xi32, #tpu.memory_space<smem>>, %arg3: memref<2xi32, #tpu.memory_space<smem>>) -> (i32, i32) {
    %c0_i32 = arith.constant 0 : i32
    %c0_i32_0 = arith.constant 0 : i32
    return %arg0, %c0_i32 : i32, i32
  }
}

</mosaic_0001>

<llo_original>
// kernel: tpu_custom_call.1
$region0: #{tpu_custom_call.1}
  #allocation0 [shape = 'u32[]', space=smem, size = 0x4, offset = 0x4, fixed_abs, tag = 'smem constant byte address 0x4 - core index']
  #allocation1 [shape = 'u32[144,128]{1,0:T(1,128)}', space=vmem, size = 0x12000, scoped, tag = 'internal scratch']
  #allocation2 [shape = 's32[1]{0}', space=sflag, size = 0x4, scoped, tag = 'scoped memory for tpu_custom_call.1']
  #allocation3 [shape = 'u8[512]{0}', space=smem, size = 0x200, scoped, tag = 'prefetched SMEM operand 0']
  #allocation4 [shape = 'u8[512]{0}', space=smem, size = 0x200, scoped, tag = 'prefetched SMEM operand 1']
  %s0 = inlined_call_operand.vmem [shape: s32[2], index: 0, kind: input, shape index: {}]
  %s1 = inlined_call_operand.vmem [shape: s32[2], index: 1, kind: input, shape index: {}]
  %s2 = inlined_call_operand.vmem [shape: bf16[256,256], index: 2, kind: input, shape index: {}]
  %s3 = inlined_call_operand.vmem [shape: f32[256,64], index: 3, kind: input, shape index: {}]
  %s4 = inlined_call_operand.vmem [shape: f32[256,64], index: 4, kind: output, shape index: {}]
  %s5 = sld [smem:[#allocation0]]
  $region90: #{tpu_custom_call.1} parent=0
    _
  %s7 = ssub.s32 1, %s5
  %s8 = scalar_select 0, %s7, %s5
  %s9 = sshll.u32 %s0, 4
  %s10 = int_to_ptr.vmem [resolvable:$true] %s9
  %12 = dma.vmem_to_smem %s10, 16, [#allocation3], [#allocation2]
  %s13 = sshll.u32 %s1, 4
  %s14 = int_to_ptr.vmem [resolvable:$true] %s13
  %16 = dma.vmem_to_smem %s14, 16, [#allocation4], [#allocation2]
  %17 = dma.done [#allocation2], 32
  %18 = sfence
  $region1: #{tpu_custom_call.1} parent=0
    #allocation5 [shape = 'u8[65536]{0}', space=vmem, size = 0x10000, scoped, tag = 'input window, operand 2']
    loop: start=0, step=1, limit=4
    $region2: #{tpu_custom_call.1} parent=1 // loop_pre_header
      _
    $region3: #{tpu_custom_call.1} parent=1 // loop_header
      %s20 = sphi 0, %s24
      %p21 = scmp.ge.s32.totalorder %s20, 4
      %s27 = sphi 0, %s39
      %s28 = sphi 0, %s35
      %s29 = sphi 0, %s27
      %s30 = sphi 0, %s28
      %s31 = sphi 0, %s29
      %s32 = sphi 0, %s30
      %s48 = sphi 0, %s50
      %s51 = sphi 0, %s48
      %s52 = sphi 0, %s51
      %s68 = sphi 0, %s52
      %s72 = sphi 0, %s72
      %s74 = sphi 0, %s72
      %s75 = sphi 0, %s74
      %s89 = sphi 0, %s75
      %s95 = sphi 0, %s97
      %s98 = sphi 0, %s95
      %s99 = sphi 0, %s98
      %s115 = sphi 0, %s99
    $region4: #{tpu_custom_call.1} parent=1 // loop_header_branch
      %23 = sbr.rel (%p21) target = $region8
    $region5: #{tpu_custom_call.1} parent=1 // loop_body
      %s25 = ssub.s32 %s20, 1
      %s26 = ssub.s32 %s20, 2
      %s33 = sadd.s32 1, %s28
      %p34 = scmp.ge.s32.totalorder %s33, 1
      %s35 = scalar_select %p34, 0, %s33
      %s36 = sadd.s32 1, %s27
      %s37 = scalar_select %p34, %s36, %s27
      %p38 = scmp.ge.s32.totalorder %s37, 2
      %s39 = scalar_select %p38, 0, %s37
      %s40 = sadd.s32 %s27, %s28
      %s41 = sld [smem:[#allocation3 + %s40]]
      %s42 = sadd.s32 %s39, %s35
      %s43 = sld [smem:[#allocation3 + %s42]]
      %s44 = ssub.s32 %s27, %s39
      %s45 = ssub.s32 %s41, %s43
      %s46 = sor.u32 %s44, %s45
      %p47 = scmp.eq.s32.totalorder %s46, 0
      %s49 = sadd.s32 %s48, 1
      %s50 = scalar_select %p47, %s48, %s49
      %p53 = pneg %p47
      %p54 = scmp.eq.s32.totalorder %s20, 1
      %p55 = por %p53, %p54
      %p56 = scmp.ne.s32.totalorder %s48, %s51
      %p57 = scmp.eq.s32.totalorder %s20, 0
      %p58 = por %p56, %p57
      %p59 = scmp.ne.s32.totalorder %s48, %s51
      %p60 = scmp.eq.s32.totalorder %s25, 1
      %p61 = por %p59, %p60
      %p62 = scmp.ne.s32.totalorder %s51, %s52
      %p63 = scmp.eq.s32.totalorder %s25, 0
      %p64 = por %p62, %p63
      %p65 = scmp.ne.s32.totalorder %s51, %s52
      %p66 = scmp.eq.s32.totalorder %s26, 1
      %p67 = por %p65, %p66
      %p69 = scmp.ne.s32.totalorder %s52, %s68
      %p70 = scmp.eq.s32.totalorder %s26, 0
      %p71 = por %p69, %p70
      %s73 = sadd.s32 %s72, 1
      %p76 = scmp.eq.s32.totalorder %s20, 1
      %p77 = scmp.ne.s32.totalorder %s72, %s74
      %p78 = scmp.eq.s32.totalorder %s20, 0
      %p79 = por %p77, %p78
      %p80 = scmp.ne.s32.totalorder %s72, %s74
      %p81 = scmp.eq.s32.totalorder %s25, 1
      %p82 = por %p80, %p81
      %p83 = scmp.ne.s32.totalorder %s74, %s75
      %p84 = scmp.eq.s32.totalorder %s25, 0
      %p85 = por %p83, %p84
      %p86 = scmp.ne.s32.totalorder %s74, %s75
      %p87 = scmp.eq.s32.totalorder %s26, 1
      %p88 = por %p86, %p87
      %p90 = scmp.ne.s32.totalorder %s75, %s89
      %p91 = scmp.eq.s32.totalorder %s26, 0
      %p92 = por %p90, %p91
      %s93 = ssub.s32 %s27, %s39
      %p94 = scmp.eq.s32.totalorder %s93, 0
      %s96 = sadd.s32 %s95, 1
      %s97 = scalar_select %p94, %s95, %s96
      %p100 = pneg %p94
      %p101 = scmp.eq.s32.totalorder %s20, 1
      %p102 = por %p100, %p101
      %p103 = scmp.ne.s32.totalorder %s95, %s98
      %p104 = scmp.eq.s32.totalorder %s20, 0
      %p105 = por %p103, %p104
      %p106 = scmp.ne.s32.totalorder %s95, %s98
      %p107 = scmp.eq.s32.totalorder %s25, 1
      %p108 = por %p106, %p107
      %p109 = scmp.ne.s32.totalorder %s98, %s99
      %p110 = scmp.eq.s32.totalorder %s25, 0
      %p111 = por %p109, %p110
      %p112 = scmp.ne.s32.totalorder %s98, %s99
      %p113 = scmp.eq.s32.totalorder %s26, 1
      %p114 = por %p112, %p113
      %p116 = scmp.ne.s32.totalorder %s99, %s115
      %p117 = scmp.eq.s32.totalorder %s26, 0
      %p118 = por %p116, %p117
      %p119 = scmp.le.s32.totalorder 1, %s20
      %p120 = scmp.lt.s32.totalorder %s20, 3
      %p121 = pnand %p119, %p120
      %p122 = pneg %p121
      // Predicated region
      $region9: #{tpu_custom_call.1} parent=5 // pred_check
        _
      $region10: #{tpu_custom_call.1} parent=5 // pred_check_branch
        %124 = sbr.rel (%p121) target = $region12
      $region11: #{tpu_custom_call.1} parent=5 // pred_region
        %s125 = ssub.s32 %s20, 1
        // Predicated region
        $region13: #{tpu_custom_call.1} parent=11 // pred_check
          %p126 = pneg %p85
        $region14: #{tpu_custom_call.1} parent=11 // pred_check_branch
          %128 = sbr.rel (%p126) target = $region16
        $region15: #{tpu_custom_call.1} parent=11 // pred_region
          _
        $region16: #{tpu_custom_call.1} parent=11 // pred_fallthru
          _
      $region12: #{tpu_custom_call.1} parent=5 // pred_fallthru
        _
      %p129 = scmp.lt.s32.totalorder %s20, 2
      // Predicated region
      $region17: #{tpu_custom_call.1} parent=5 // pred_check
        %p130 = pneg %p129
      $region18: #{tpu_custom_call.1} parent=5 // pred_check_branch
        %132 = sbr.rel (%p130) target = $region20
      $region19: #{tpu_custom_call.1} parent=5 // pred_region
        // Predicated region
        $region21: #{tpu_custom_call.1} parent=19 // pred_check
          %p133 = pneg %p58
        $region22: #{tpu_custom_call.1} parent=19 // pred_check_branch
          %135 = sbr.rel (%p133) target = $region24
        $region23: #{tpu_custom_call.1} parent=19 // pred_region
          %s136 = sand.u32 %s48, 1
          %s137 = sand.u32 %s48, 1
          %s138 = smul.addr %s137, 64
          %s139 = scalar_lea.vmem [#allocation5], %s138
          %s140 = sadd.s32 %s27, %s28
          %s141 = sld [smem:[#allocation3 + %s140]]
          %s142 = smul.u32 16, %s27
          %s143 = smul.addr %s142, 2
          %s144 = sadd.s32 %s141, %s143
          %s145 = smul.addr %s144, 4
          %s146 = scalar_lea.vmem %s2, %s145
          // Predicated region
          $region25: #{tpu_custom_call.1} parent=23 // pred_check
            _
          $region26: #{tpu_custom_call.1} parent=23 // pred_check_branch
            %148 = sbr.rel (0) target = $region28
          $region27: #{tpu_custom_call.1} parent=23 // pred_region
            // Predicated region
            $region29: #{tpu_custom_call.1} parent=27 // pred_check
              _
            $region30: #{tpu_custom_call.1} parent=27 // pred_check_branch
              %150 = sbr.rel target = $region32
            $region31: #{tpu_custom_call.1} parent=27 // pred_region
              // Predicated region
              $region44: #{tpu_custom_call.1} parent=31 // pred_check
                _
              $region45: #{tpu_custom_call.1} parent=31 // pred_check_branch
                %195 = sbr.rel (0) target = $region47
              $region46: #{tpu_custom_call.1} parent=31 // pred_region
                loop: start=0, step=1, limit=1
                $region48: #{tpu_custom_call.1} parent=46 // loop_pre_header
                  _
                $region49: #{tpu_custom_call.1} parent=46 // loop_header
                  %s197 = sphi 0, %s201
                  %p198 = scmp.ge.s32.totalorder %s197, 1
                  %s202 = sphi %s146, %s146
                  %s203 = sphi %s139, %s139
                $region50: #{tpu_custom_call.1} parent=46 // loop_header_branch
                  %200 = sbr.rel (%p198) target = $region54
                $region51: #{tpu_custom_call.1} parent=46 // loop_body
                  _
                $region52: #{tpu_custom_call.1} parent=46 // loop_footer
                  %s201 = sadd.s32 1, %s197
                $region53: #{tpu_custom_call.1} parent=46 // loop_footer_branch
                  %196 = sbr.rel target = $region49
                $region54: #{tpu_custom_call.1} parent=46 // loop_exit
                  _
                loop: start=0, step=1, limit=1
                $region55: #{tpu_custom_call.1} parent=46 // loop_pre_header
                  _
                $region56: #{tpu_custom_call.1} parent=46 // loop_header
                  %s206 = sphi 0, %s210
                  %p207 = scmp.ge.s32.totalorder %s206, 1
                  %s211 = sphi %s146, %s146
                  %s212 = sphi %s139, %s139
                $region57: #{tpu_custom_call.1} parent=46 // loop_header_branch
                  %209 = sbr.rel (%p207) target = $region61
                $region58: #{tpu_custom_call.1} parent=46 // loop_body
                  %v213 = vld [vmem:[%s211] sm:$0xf]
                  %214 = vst [vmem:[%s212] sm:$0xf] %v213
                  %v215 = vld [vmem:[%s211 + $0x8] sm:$0xf]
                  %216 = vst [vmem:[%s212 + $0x4] sm:$0xf] %v215
                  %v217 = vld [vmem:[%s211 + $0x10] sm:$0xf]
                  %218 = vst [vmem:[%s212 + $0x8] sm:$0xf] %v217
                  %v219 = vld [vmem:[%s211 + $0x18] sm:$0xf]
                  %220 = vst [vmem:[%s212 + $0xc] sm:$0xf] %v219
                  %v221 = vld [vmem:[%s211 + $0x20] sm:$0xf]
                  %222 = vst [vmem:[%s212 + $0x10] sm:$0xf] %v221
                  %v223 = vld [vmem:[%s211 + $0x28] sm:$0xf]
                  %224 = vst [vmem:[%s212 + $0x14] sm:$0xf] %v223
                  %v225 = vld [vmem:[%s211 + $0x30] sm:$0xf]
                  %226 = vst [vmem:[%s212 + $0x18] sm:$0xf] %v225
                  %v227 = vld [vmem:[%s211 + $0x38] sm:$0xf]
                  %228 = vst [vmem:[%s212 + $0x1c] sm:$0xf] %v227
                  %v229 = vld [vmem:[%s211 + $0x40] sm:$0xf]
                  %230 = vst [vmem:[%s212 + $0x20] sm:$0xf] %v229
                  %v231 = vld [vmem:[%s211 + $0x48] sm:$0xf]
                  %232 = vst [vmem:[%s212 + $0x24] sm:$0xf] %v231
                  %v233 = vld [vmem:[%s211 + $0x50] sm:$0xf]
                  %234 = vst [vmem:[%s212 + $0x28] sm:$0xf] %v233
                  %v235 = vld [vmem:[%s211 + $0x58] sm:$0xf]
                  %236 = vst [vmem:[%s212 + $0x2c] sm:$0xf] %v235
                  %v237 = vld [vmem:[%s211 + $0x60] sm:$0xf]
                  %238 = vst [vmem:[%s212 + $0x30] sm:$0xf] %v237
                  %v239 = vld [vmem:[%s211 + $0x68] sm:$0xf]
                  %240 = vst [vmem:[%s212 + $0x34] sm:$0xf] %v239
                  %v241 = vld [vmem:[%s211 + $0x70] sm:$0xf]
                  %242 = vst [vmem:[%s212 + $0x38] sm:$0xf] %v241
                  %v243 = vld [vmem:[%s211 + $0x78] sm:$0xf]
                  %244 = vst [vmem:[%s212 + $0x3c] sm:$0xf] %v243
                $region59: #{tpu_custom_call.1} parent=46 // loop_footer
                  %s210 = sadd.s32 1, %s206
                $region60: #{tpu_custom_call.1} parent=46 // loop_footer_branch
                  %205 = sbr.rel target = $region56
                $region61: #{tpu_custom_call.1} parent=46 // loop_exit
                  _
              $region47: #{tpu_custom_call.1} parent=31 // pred_fallthru
                _
            $region32: #{tpu_custom_call.1} parent=27 // pred_fallthru
              _
            // Predicated region
            $region33: #{tpu_custom_call.1} parent=27 // pred_check
              _
            $region34: #{tpu_custom_call.1} parent=27 // pred_check_branch
              %152 = sbr.rel (0) target = $region36
            $region35: #{tpu_custom_call.1} parent=27 // pred_region
              loop: start=0, step=1, limit=1
              $region37: #{tpu_custom_call.1} parent=35 // loop_pre_header
                _
              $region38: #{tpu_custom_call.1} parent=35 // loop_header
                %s155 = sphi 0, %s159
                %p156 = scmp.ge.s32.totalorder %s155, 1
                %s160 = sphi %s146, %s146
                %s161 = sphi %s139, %s139
              $region39: #{tpu_custom_call.1} parent=35 // loop_header_branch
                %158 = sbr.rel (%p156) target = $region43
              $region40: #{tpu_custom_call.1} parent=35 // loop_body
                %v162 = vld [vmem:[%s160] sm:$0xf]
                %163 = vst [vmem:[%s161] sm:$0xf] %v162
                %v164 = vld [vmem:[%s160 + $0x8] sm:$0xf]
                %165 = vst [vmem:[%s161 + $0x4] sm:$0xf] %v164
                %v166 = vld [vmem:[%s160 + $0x10] sm:$0xf]
                %167 = vst [vmem:[%s161 + $0x8] sm:$0xf] %v166
                %v168 = vld [vmem:[%s160 + $0x18] sm:$0xf]
                %169 = vst [vmem:[%s161 + $0xc] sm:$0xf] %v168
                %v170 = vld [vmem:[%s160 + $0x20] sm:$0xf]
                %171 = vst [vmem:[%s161 + $0x10] sm:$0xf] %v170
                %v172 = vld [vmem:[%s160 + $0x28] sm:$0xf]
                %173 = vst [vmem:[%s161 + $0x14] sm:$0xf] %v172
                %v174 = vld [vmem:[%s160 + $0x30] sm:$0xf]
                %175 = vst [vmem:[%s161 + $0x18] sm:$0xf] %v174
                %v176 = vld [vmem:[%s160 + $0x38] sm:$0xf]
                %177 = vst [vmem:[%s161 + $0x1c] sm:$0xf] %v176
                %v178 = vld [vmem:[%s160 + $0x40] sm:$0xf]
                %179 = vst [vmem:[%s161 + $0x20] sm:$0xf] %v178
                %v180 = vld [vmem:[%s160 + $0x48] sm:$0xf]
                %181 = vst [vmem:[%s161 + $0x24] sm:$0xf] %v180
                %v182 = vld [vmem:[%s160 + $0x50] sm:$0xf]
                %183 = vst [vmem:[%s161 + $0x28] sm:$0xf] %v182
                %v184 = vld [vmem:[%s160 + $0x58] sm:$0xf]
                %185 = vst [vmem:[%s161 + $0x2c] sm:$0xf] %v184
                %v186 = vld [vmem:[%s160 + $0x60] sm:$0xf]
                %187 = vst [vmem:[%s161 + $0x30] sm:$0xf] %v186
                %v188 = vld [vmem:[%s160 + $0x68] sm:$0xf]
                %189 = vst [vmem:[%s161 + $0x34] sm:$0xf] %v188
                %v190 = vld [vmem:[%s160 + $0x70] sm:$0xf]
                %191 = vst [vmem:[%s161 + $0x38] sm:$0xf] %v190
                %v192 = vld [vmem:[%s160 + $0x78] sm:$0xf]
                %193 = vst [vmem:[%s161 + $0x3c] sm:$0xf] %v192
              $region41: #{tpu_custom_call.1} parent=35 // loop_footer
                %s159 = sadd.s32 1, %s155
              $region42: #{tpu_custom_call.1} parent=35 // loop_footer_branch
                %154 = sbr.rel target = $region38
              $region43: #{tpu_custom_call.1} parent=35 // loop_exit
                _
            $region36: #{tpu_custom_call.1} parent=27 // pred_fallthru
              _
          $region28: #{tpu_custom_call.1} parent=23 // pred_fallthru
            _
          %245 = vnop
        $region24: #{tpu_custom_call.1} parent=19 // pred_fallthru
          _
      $region20: #{tpu_custom_call.1} parent=5 // pred_fallthru
        _
      %p246 = scmp.le.s32.totalorder 1, %s20
      %p247 = scmp.lt.s32.totalorder %s20, 3
      %p248 = pnand %p246, %p247
      %p249 = pneg %p248
      // Predicated region
      $region62: #{tpu_custom_call.1} parent=5 // pred_check
        _
      $region63: #{tpu_custom_call.1} parent=5 // pred_check_branch
        %251 = sbr.rel (%p248) target = $region65
      $region64: #{tpu_custom_call.1} parent=5 // pred_region
        %s252 = ssub.s32 %s20, 1
        %s253 = sand.u32 %s51, 1
        %s254 = sand.u32 %s51, 1
        %s255 = smul.addr %s254, 64
        %s256 = scalar_lea.vmem [#allocation5], %s255
        // Predicated region
        $region66: #{tpu_custom_call.1} parent=64 // pred_check
          %p257 = pneg %p64
        $region67: #{tpu_custom_call.1} parent=64 // pred_check_branch
          %259 = sbr.rel (%p257) target = $region69
        $region68: #{tpu_custom_call.1} parent=64 // pred_region
          _
        $region69: #{tpu_custom_call.1} parent=64 // pred_fallthru
          _
        %s260 = sand.u32 %s51, 1
        %s261 = sand.u32 %s51, 1
        %s262 = smul.addr %s261, 64
        %s263 = scalar_lea.vmem [#allocation5], %s262
        %p264 = pneg %p64
        %p265 = pneg %p61
        %p266 = pneg %p85
        %p267 = pneg %p82
        %p268 = pneg %p111
        %p269 = pneg %p108
        %s270 = smul.u32 16, %s29
        %p271 = scmp.lt.s32.totalorder %s270, 31
        %s272 = scalar_select %p271, %s270, 31
        %s273 = smul.addr %s272, 8
        %s274 = scalar_lea.vmem %s4, %s273
        %s275 = sadd.s32 %s29, %s30
        %s276 = sld [smem:[#allocation3 + %s275]]
        %s277 = smul.u32 16, %s29
        %s278 = smul.u32 16, %s29
        %p279 = scmp.lt.s32.totalorder %s278, 31
        %s280 = scalar_select %p279, %s278, 31
        %s281 = smul.addr %s280, 8
        %s282 = scalar_lea.vmem %s4, %s281
        %s283 = smul.u32 16, %s29
        %p285 = scmp.eq.s32.totalorder %s30, 0
        // Predicated region
        $region70: #{tpu_custom_call.1} parent=64 // pred_check
          %p286 = pneg %p285
        $region71: #{tpu_custom_call.1} parent=64 // pred_check_branch
          %288 = sbr.rel (%p286) target = $region73
        $region72: #{tpu_custom_call.1} parent=64 // pred_region
          %vm289 = vcmask 523264
          %290 = vst.msk [vmem:[%s282] sm:$0xff] %vm289, 0.0
          %291 = vst.msk [vmem:[%s282 + $0x8] sm:$0xff] %vm289, 0.0
          %292 = vst.msk [vmem:[%s282 + $0x10] sm:$0xff] %vm289, 0.0
          %293 = vst.msk [vmem:[%s282 + $0x18] sm:$0xff] %vm289, 0.0
          %294 = vst.msk [vmem:[%s282 + $0x20] sm:$0xff] %vm289, 0.0
          %295 = vst.msk [vmem:[%s282 + $0x28] sm:$0xff] %vm289, 0.0
          %296 = vst.msk [vmem:[%s282 + $0x30] sm:$0xff] %vm289, 0.0
          %297 = vst.msk [vmem:[%s282 + $0x38] sm:$0xff] %vm289, 0.0
          %298 = vst.msk [vmem:[%s282 + $0x40] sm:$0xff] %vm289, 0.0
          %299 = vst.msk [vmem:[%s282 + $0x48] sm:$0xff] %vm289, 0.0
          %300 = vst.msk [vmem:[%s282 + $0x50] sm:$0xff] %vm289, 0.0
          %301 = vst.msk [vmem:[%s282 + $0x58] sm:$0xff] %vm289, 0.0
          %302 = vst.msk [vmem:[%s282 + $0x60] sm:$0xff] %vm289, 0.0
          %303 = vst.msk [vmem:[%s282 + $0x68] sm:$0xff] %vm289, 0.0
          %304 = vst.msk [vmem:[%s282 + $0x70] sm:$0xff] %vm289, 0.0
          %305 = vst.msk [vmem:[%s282 + $0x78] sm:$0xff] %vm289, 0.0
        $region73: #{tpu_custom_call.1} parent=64 // pred_fallthru
          _
        %s306 = sadd.s32 %s29, %s30
        %s307 = sld [smem:[#allocation4 + %s306]]
        %p308 = scmp.ne.s32.totalorder %s307, 0
        // Predicated region
        $region74: #{tpu_custom_call.1} parent=64 // pred_check
          %p309 = pneg %p308
        $region75: #{tpu_custom_call.1} parent=64 // pred_check_branch
          %311 = sbr.rel (%p309) target = $region77
        $region76: #{tpu_custom_call.1} parent=64 // pred_region
          %s312 = sld [smem:[#allocation3 + %s306]]
          %s313 = smul.u32 %s312, 128
          %s314 = scalar_lea.vmem %s3, %s313
          %v315 = vld [vmem:[%s314] sm:$0xff]
          %v316 = vld [vmem:[%s314 + $0x8] sm:$0xff]
          %v317 = vld [vmem:[%s314 + $0x10] sm:$0xff]
          %v318 = vld [vmem:[%s314 + $0x18] sm:$0xff]
          %v319 = vld [vmem:[%s314 + $0x20] sm:$0xff]
          %v320 = vld [vmem:[%s314 + $0x28] sm:$0xff]
          %v321 = vld [vmem:[%s314 + $0x30] sm:$0xff]
          %v322 = vld [vmem:[%s314 + $0x38] sm:$0xff]
          %v323 = vld [vmem:[%s314 + $0x40] sm:$0xff]
          %v324 = vld [vmem:[%s314 + $0x48] sm:$0xff]
          %v325 = vld [vmem:[%s314 + $0x50] sm:$0xff]
          %v326 = vld [vmem:[%s314 + $0x58] sm:$0xff]
          %v327 = vld [vmem:[%s314 + $0x60] sm:$0xff]
          %v328 = vld [vmem:[%s314 + $0x68] sm:$0xff]
          %v329 = vld [vmem:[%s314 + $0x70] sm:$0xff]
          %v330 = vld [vmem:[%s314 + $0x78] sm:$0xff]
          %v331 = vld [vmem:[%s282] sm:$0xff]
          %v332 = vld [vmem:[%s282 + $0x8] sm:$0xff]
          %v333 = vld [vmem:[%s282 + $0x10] sm:$0xff]
          %v334 = vld [vmem:[%s282 + $0x18] sm:$0xff]
          %v335 = vld [vmem:[%s282 + $0x20] sm:$0xff]
          %v336 = vld [vmem:[%s282 + $0x28] sm:$0xff]
          %v337 = vld [vmem:[%s282 + $0x30] sm:$0xff]
          %v338 = vld [vmem:[%s282 + $0x38] sm:$0xff]
          %v339 = vld [vmem:[%s282 + $0x40] sm:$0xff]
          %v340 = vld [vmem:[%s282 + $0x48] sm:$0xff]
          %v341 = vld [vmem:[%s282 + $0x50] sm:$0xff]
          %v342 = vld [vmem:[%s282 + $0x58] sm:$0xff]
          %v343 = vld [vmem:[%s282 + $0x60] sm:$0xff]
          %v344 = vld [vmem:[%s282 + $0x68] sm:$0xff]
          %v345 = vld [vmem:[%s282 + $0x70] sm:$0xff]
          %v346 = vld [vmem:[%s282 + $0x78] sm:$0xff]
          %v347 = vld [vmem:[%s256] sm:$0xf]
          %v348 = vld [vmem:[%s256 + $0x4] sm:$0xf]
          %v349 = vld [vmem:[%s256 + $0x8] sm:$0xf]
          %v350 = vld [vmem:[%s256 + $0xc] sm:$0xf]
          %v351 = vld [vmem:[%s256 + $0x10] sm:$0xf]
          %v352 = vld [vmem:[%s256 + $0x14] sm:$0xf]
          %v353 = vld [vmem:[%s256 + $0x18] sm:$0xf]
          %v354 = vld [vmem:[%s256 + $0x1c] sm:$0xf]
          %v355 = vld [vmem:[%s256 + $0x20] sm:$0xf]
          %v356 = vld [vmem:[%s256 + $0x24] sm:$0xf]
          %v357 = vld [vmem:[%s256 + $0x28] sm:$0xf]
          %v358 = vld [vmem:[%s256 + $0x2c] sm:$0xf]
          %v359 = vld [vmem:[%s256 + $0x30] sm:$0xf]
          %v360 = vld [vmem:[%s256 + $0x34] sm:$0xf]
          %v361 = vld [vmem:[%s256 + $0x38] sm:$0xf]
          %v362 = vld [vmem:[%s256 + $0x3c] sm:$0xf]
          %v363 = vpack.c.bf16 %v316, %v315
          %v364 = vpack.c.bf16 %v318, %v317
          %v365 = vpack.c.bf16 %v320, %v319
          %v366 = vpack.c.bf16 %v322, %v321
          %v367 = vpack.c.bf16 %v324, %v323
          %v368 = vpack.c.bf16 %v326, %v325
          %v369 = vpack.c.bf16 %v328, %v327
          %v370 = vpack.c.bf16 %v330, %v329
          %v387 = vunpack.c.l.b16 %v347
          %v388 = vunpack.c.l.b16 %v348
          %v389 = vunpack.c.l.b16 %v349
          %v390 = vunpack.c.l.b16 %v350
          %v391 = vunpack.c.l.b16 %v351
          %v392 = vunpack.c.l.b16 %v352
          %v393 = vunpack.c.l.b16 %v353
          %v394 = vunpack.c.l.b16 %v354
          %v395 = vunpack.c.l.b16 %v355
          %v396 = vunpack.c.l.b16 %v356
          %v397 = vunpack.c.l.b16 %v357
          %v398 = vunpack.c.l.b16 %v358
          %v399 = vunpack.c.l.b16 %v359
          %v400 = vunpack.c.l.b16 %v360
          %v401 = vunpack.c.l.b16 %v361
          %v402 = vunpack.c.l.b16 %v362
          %v403 = vpack.c.b16 %v388, %v387
          %v404 = vpack.c.b16 %v390, %v389
          %v405 = vpack.c.b16 %v392, %v391
          %v406 = vpack.c.b16 %v394, %v393
          %v407 = vpack.c.b16 %v396, %v395
          %v408 = vpack.c.b16 %v398, %v397
          %v409 = vpack.c.b16 %v400, %v399
          %v410 = vpack.c.b16 %v402, %v401
          %419 = vmatprep.subr.bf16.mxu0 0
          %420 = vmatpush1.bf16.msra.mxu0 %v363
          %421 = vmatprep.subr.bf16.mxu0 0
          %422 = vmatpush1.bf16.msra.mxu0 %v364
          %423 = vmatprep.subr.bf16.mxu0 0
          %424 = vmatpush1.bf16.msra.mxu0 %v365
          %425 = vmatprep.subr.bf16.mxu0 0
          %426 = vmatpush1.bf16.msra.mxu0 %v366
          %427 = vmatprep.subr.bf16.mxu0 0
          %428 = vmatpush1.bf16.msra.mxu0 %v367
          %429 = vmatprep.subr.bf16.mxu0 0
          %430 = vmatpush1.bf16.msra.mxu0 %v368
          %431 = vmatprep.subr.bf16.mxu0 0
          %432 = vmatpush1.bf16.msra.mxu0 %v369
          %433 = vmatprep.subr.bf16.mxu0 0
          %434 = vmatpush1.bf16.msra.mxu0 %v370
          %435 = vmatprep.subr.bf16.mxu0 0
          %436 = vmatpush1.bf16.msra.mxu0 0
          %437 = vmatprep.subr.bf16.mxu0 0
          %438 = vmatpush1.bf16.msra.mxu0 0
          %439 = vmatprep.subr.bf16.mxu0 0
          %440 = vmatpush1.bf16.msra.mxu0 0
          %441 = vmatprep.subr.bf16.mxu0 0
          %442 = vmatpush1.bf16.msra.mxu0 0
          %443 = vmatprep.subr.bf16.mxu0 0
          %444 = vmatpush1.bf16.msra.mxu0 0
          %445 = vmatprep.subr.bf16.mxu0 0
          %446 = vmatpush1.bf16.msra.mxu0 0
          %447 = vmatprep.subr.bf16.mxu0 0
          %448 = vmatpush1.bf16.msra.mxu0 0
          %449 = vmatprep.subr.bf16.mxu0 0
          %450 = vmatpush1.bf16.msra.mxu0 0
          %451 = vmatprep.mubr.bf16.mxu0 0
          %452 = vmatmul.mubr.bf16.gmra.mrb[0].mxu0 %v403
          %v453 = vpop.f32.mrb[0].mxu0
          %v454 = vadd.f32 0.0, %v453
          %v455 = vpop.f32.mrb[0].mxu0
          %v456 = vpop.f32.mrb[0].mxu0
          %v457 = vadd.f32 0.0, %v456
          %v458 = vpop.f32.mrb[0].mxu0
          %459 = vmatprep.mubr.bf16.mxu0 0
          %460 = vmatmul.mubr.bf16.gmra.mrb[0].mxu0 %v404
          %v461 = vpop.f32.mrb[0].mxu0
          %v462 = vadd.f32 0.0, %v461
          %v463 = vpop.f32.mrb[0].mxu0
          %v464 = vpop.f32.mrb[0].mxu0
          %v465 = vadd.f32 0.0, %v464
          %v466 = vpop.f32.mrb[0].mxu0
          %467 = vmatprep.mubr.bf16.mxu0 0
          %468 = vmatmul.mubr.bf16.gmra.mrb[0].mxu0 %v405
          %v469 = vpop.f32.mrb[0].mxu0
          %v470 = vadd.f32 0.0, %v469
          %v471 = vpop.f32.mrb[0].mxu0
          %v472 = vpop.f32.mrb[0].mxu0
          %v473 = vadd.f32 0.0, %v472
          %v474 = vpop.f32.mrb[0].mxu0
          %475 = vmatprep.mubr.bf16.mxu0 0
          %476 = vmatmul.mubr.bf16.gmra.mrb[0].mxu0 %v406
          %v477 = vpop.f32.mrb[0].mxu0
          %v478 = vadd.f32 0.0, %v477
          %v479 = vpop.f32.mrb[0].mxu0
          %v480 = vpop.f32.mrb[0].mxu0
          %v481 = vadd.f32 0.0, %v480
          %v482 = vpop.f32.mrb[0].mxu0
          %483 = vmatprep.mubr.bf16.mxu0 0
          %484 = vmatmul.mubr.bf16.gmra.mrb[0].mxu0 %v407
          %v485 = vpop.f32.mrb[0].mxu0
          %v486 = vadd.f32 0.0, %v485
          %v487 = vpop.f32.mrb[0].mxu0
          %v488 = vpop.f32.mrb[0].mxu0
          %v489 = vadd.f32 0.0, %v488
          %v490 = vpop.f32.mrb[0].mxu0
          %491 = vmatprep.mubr.bf16.mxu0 0
          %492 = vmatmul.mubr.bf16.gmra.mrb[0].mxu0 %v408
          %v493 = vpop.f32.mrb[0].mxu0
          %v494 = vadd.f32 0.0, %v493
          %v495 = vpop.f32.mrb[0].mxu0
          %v496 = vpop.f32.mrb[0].mxu0
          %v497 = vadd.f32 0.0, %v496
          %v498 = vpop.f32.mrb[0].mxu0
          %499 = vmatprep.mubr.bf16.mxu0 0
          %500 = vmatmul.mubr.bf16.gmra.mrb[0].mxu0 %v409
          %v501 = vpop.f32.mrb[0].mxu0
          %v502 = vadd.f32 0.0, %v501
          %v503 = vpop.f32.mrb[0].mxu0
          %v504 = vpop.f32.mrb[0].mxu0
          %v505 = vadd.f32 0.0, %v504
          %v506 = vpop.f32.mrb[0].mxu0
          %507 = vmatprep.mubr.bf16.mxu0 0
          %508 = vmatmul.mubr.bf16.gmra.mrb[0].mxu0 %v410
          %v509 = vpop.f32.mrb[0].mxu0
          %v510 = vadd.f32 0.0, %v509
          %v511 = vpop.f32.mrb[0].mxu0
          %v512 = vpop.f32.mrb[0].mxu0
          %v513 = vadd.f32 0.0, %v512
          %v514 = vpop.f32.mrb[0].mxu0
          %515 = vdwg.mxu0
          %v516 = vadd.f32 %v331, %v454
          %v517 = vadd.f32 %v332, %v457
          %v518 = vadd.f32 %v333, %v462
          %v519 = vadd.f32 %v334, %v465
          %v520 = vadd.f32 %v335, %v470
          %v521 = vadd.f32 %v336, %v473
          %v522 = vadd.f32 %v337, %v478
          %v523 = vadd.f32 %v338, %v481
          %v524 = vadd.f32 %v339, %v486
          %v525 = vadd.f32 %v340, %v489
          %v526 = vadd.f32 %v341, %v494
          %v527 = vadd.f32 %v342, %v497
          %v528 = vadd.f32 %v343, %v502
          %v529 = vadd.f32 %v344, %v505
          %v530 = vadd.f32 %v345, %v510
          %v531 = vadd.f32 %v346, %v513
          %vm532 = vcmask 523264
          %533 = vst.msk [vmem:[%s282] sm:$0xff] %vm532, %v516
          %534 = vst.msk [vmem:[%s282 + $0x8] sm:$0xff] %vm532, %v517
          %535 = vst.msk [vmem:[%s282 + $0x10] sm:$0xff] %vm532, %v518
          %536 = vst.msk [vmem:[%s282 + $0x18] sm:$0xff] %vm532, %v519
          %537 = vst.msk [vmem:[%s282 + $0x20] sm:$0xff] %vm532, %v520
          %538 = vst.msk [vmem:[%s282 + $0x28] sm:$0xff] %vm532, %v521
          %539 = vst.msk [vmem:[%s282 + $0x30] sm:$0xff] %vm532, %v522
          %540 = vst.msk [vmem:[%s282 + $0x38] sm:$0xff] %vm532, %v523
          %541 = vst.msk [vmem:[%s282 + $0x40] sm:$0xff] %vm532, %v524
          %542 = vst.msk [vmem:[%s282 + $0x48] sm:$0xff] %vm532, %v525
          %543 = vst.msk [vmem:[%s282 + $0x50] sm:$0xff] %vm532, %v526
          %544 = vst.msk [vmem:[%s282 + $0x58] sm:$0xff] %vm532, %v527
          %545 = vst.msk [vmem:[%s282 + $0x60] sm:$0xff] %vm532, %v528
          %546 = vst.msk [vmem:[%s282 + $0x68] sm:$0xff] %vm532, %v529
          %547 = vst.msk [vmem:[%s282 + $0x70] sm:$0xff] %vm532, %v530
          %548 = vst.msk [vmem:[%s282 + $0x78] sm:$0xff] %vm532, %v531
        $region77: #{tpu_custom_call.1} parent=64 // pred_fallthru
          _
        %s549 = smul.u32 16, %s29
        %p550 = scmp.lt.s32.totalorder %s549, 31
        %s551 = scalar_select %p550, %s549, 31
        %s552 = smul.addr %s551, 8
        %s553 = scalar_lea.vmem %s4, %s552
        // Predicated region
        $region78: #{tpu_custom_call.1} parent=64 // pred_check
          %p554 = pneg %p108
        $region79: #{tpu_custom_call.1} parent=64 // pred_check_branch
          %556 = sbr.rel (%p554) target = $region81
        $region80: #{tpu_custom_call.1} parent=64 // pred_region
          %s557 = smul.u32 16, %s29
        $region81: #{tpu_custom_call.1} parent=64 // pred_fallthru
          _
      $region65: #{tpu_custom_call.1} parent=5 // pred_fallthru
        _
      %p558 = scmp.le.s32.totalorder 2, %s20
      // Predicated region
      $region82: #{tpu_custom_call.1} parent=5 // pred_check
        %p559 = pneg %p558
      $region83: #{tpu_custom_call.1} parent=5 // pred_check_branch
        %561 = sbr.rel (%p559) target = $region85
      $region84: #{tpu_custom_call.1} parent=5 // pred_region
        %s562 = ssub.s32 %s20, 2
        // Predicated region
        $region86: #{tpu_custom_call.1} parent=84 // pred_check
          %p563 = pneg %p114
        $region87: #{tpu_custom_call.1} parent=84 // pred_check_branch
          %565 = sbr.rel (%p563) target = $region89
        $region88: #{tpu_custom_call.1} parent=84 // pred_region
          %s566 = smul.u32 16, %s31
          %p567 = scmp.lt.s32.totalorder %s566, 31
          %s568 = scalar_select %p567, %s566, 31
          %s569 = smul.addr %s568, 8
          %s570 = scalar_lea.vmem %s4, %s569
        $region89: #{tpu_custom_call.1} parent=84 // pred_fallthru
          _
      $region85: #{tpu_custom_call.1} parent=5 // pred_fallthru
        _
    $region6: #{tpu_custom_call.1} parent=1 // loop_footer
      %s24 = sadd.s32 1, %s20
    $region7: #{tpu_custom_call.1} parent=1 // loop_footer_branch
      %19 = sbr.rel target = $region3
    $region8: #{tpu_custom_call.1} parent=1 // loop_exit
      _

</llo_original>
